<compile_context>
chip_gen: v6e
topology: v6e:2x2x1
jax: 0.10.0
libtpu: 0.0.40
codegen_flags: <defaults>
</compile_context>

<pallas_src>
import functools

import jax
import jax.numpy as jnp
from jax.experimental import pallas as pl
from jax.experimental.pallas import tpu as pltpu


def _frozen_bn_kernel(x_ref, params_ref, o_ref):
    # x_ref:      (TR, TC) rows are (n, c) pairs on sublanes, spatial on lanes
    # params_ref: (TR, 2)  f32 per-row [scale, shift], broadcast across lanes
    x = x_ref[...].astype(jnp.float32)
    scale = params_ref[:, 0:1]
    shift = params_ref[:, 1:2]
    o_ref[...] = (x * scale + shift).astype(o_ref.dtype)


def _pick_block(dim, preferred, quantum):
    """Block size for one of the last-two dims.

    Either the full extent (always legal, even if not a multiple of the
    (8, 128) quantum) or a multiple of `quantum` <= preferred; a ragged last
    grid block is fine — Pallas masks the overhang.
    """
    if dim <= preferred:
        return dim
    return max(quantum, (preferred // quantum) * quantum)


def _row_quantum(dtype):
    """Sublane quantum: sub-32-bit dtypes pack rows along sublanes."""
    itemsize = jnp.dtype(dtype).itemsize
    return {4: 8, 2: 16, 1: 32}.get(itemsize, 8)


@functools.partial(
    jax.jit, static_argnames=("eps", "tile_rows", "tile_cols", "donate"))
def frozen_batchnorm2d(x_nchw, weight, bias, running_mean, running_var,
                       eps=1e-5, tile_rows=256, tile_cols=4096, donate=False):
    """y = (x - mean) / sqrt(var + eps) * weight + bias, per channel (NCHW in/out).

    Set donate=True only if the caller actually donates x's buffer (e.g. via
    jax.jit donate_argnums or a dead producer); otherwise the in-place alias
    would force a defensive full copy and cost bandwidth instead of saving it.
    """
    n, c, h, w = x_nchw.shape
    rows, cols = n * c, h * w

    # Fold the frozen stats into a single per-channel affine, in f32.
    scale = weight.astype(jnp.float32) * jax.lax.rsqrt(
        running_var.astype(jnp.float32) + eps)                      # (C,)
    shift = bias.astype(jnp.float32) - running_mean.astype(jnp.float32) * scale

    # Small-spatial guard: with < 128 lanes every store becomes a masked
    # partial store — let XLA fuse the broadcast affine instead.
    if cols < 128:
        y = (x_nchw.astype(jnp.float32) * scale[None, :, None, None]
             + shift[None, :, None, None])
        return y.astype(x_nchw.dtype)

    # Zero-copy layout change: NCHW -> (N*C, H*W).  Row r maps to channel r % C.
    x_rows = x_nchw.reshape(rows, cols)
    # Pack per-row [scale, shift] into one (rows, 2) f32 array: one DMA stream,
    # half the lane-padding of two (rows, 1) inputs.
    params = jnp.stack([jnp.tile(scale, n), jnp.tile(shift, n)], axis=-1)

    tr = _pick_block(rows, tile_rows, _row_quantum(x_nchw.dtype))
    tc = _pick_block(cols, tile_cols, 128)
    grid = (pl.cdiv(rows, tr), pl.cdiv(cols, tc))

    out_rows = pl.pallas_call(
        _frozen_bn_kernel,
        out_shape=jax.ShapeDtypeStruct((rows, cols), x_nchw.dtype),
        grid_spec=pltpu.PrefetchScalarGridSpec(
            num_scalar_prefetch=0,
            grid=grid,
            in_specs=[
                pl.BlockSpec((tr, tc), lambda i, j: (i, j)),   # activations
                pl.BlockSpec((tr, 2), lambda i, j: (i, 0)),    # [scale, shift]
            ],
            out_specs=pl.BlockSpec((tr, tc), lambda i, j: (i, j)),
        ),
        # In-place on the activation slab only when its buffer is donatable.
        input_output_aliases=({0: 0} if donate else {}),
        compiler_params=pltpu.CompilerParams(
            dimension_semantics=("parallel", "parallel"),
            # Double-buffered in+out at ~4 MiB f32 blocks ≈ 17 MiB; 28 MiB
            # leaves headroom yet stays under v7x's 64 MiB physical VMEM.
            vmem_limit_bytes=28 * 1024 * 1024),
    )(x_rows, params)

    return out_rows.reshape(n, c, h, w)


def _reference(x, weight, bias, running_mean, running_var, eps):
    scale = weight * jax.lax.rsqrt(running_var + eps)
    shift = bias - running_mean * scale
    return x * scale[None, :, None, None] + shift[None, :, None, None]


if __name__ == "__main__":
    key = jax.random.PRNGKey(0)
    k_x, k_w, k_b, k_m, k_v, k_x2 = jax.random.split(key, 6)

    N, C, H, W = 2, 4, 16, 16
    x = jax.random.normal(k_x, (N, C, H, W), dtype=jnp.float32)

    # Deterministic "frozen" parameters (shapes a BatchNorm2d(C) would carry).
    weight = jax.random.normal(k_w, (C,), dtype=jnp.float32) * 0.1 + 1.0
    bias = jax.random.normal(k_b, (C,), dtype=jnp.float32) * 0.1
    running_mean = jax.random.normal(k_m, (C,), dtype=jnp.float32) * 0.1
    running_var = jax.random.uniform(k_v, (C,), dtype=jnp.float32,
                                     minval=0.5, maxval=1.5)
    eps = 1e-5

    # Pallas path (H*W = 256 >= 128 lanes).
    ref = _reference(x, weight, bias, running_mean, running_var, eps)
    out = frozen_batchnorm2d(x, weight, bias, running_mean, running_var, eps=eps)
    out = jax.block_until_ready(out)
    assert out.shape == (N, C, H, W)
    assert jnp.allclose(out, ref, atol=1e-5, rtol=1e-5), "mismatch vs reference"

    # Small-spatial fallback path (H*W = 49 < 128 -> XLA-fused affine).
    x_small = jax.random.normal(k_x2, (N, C, 7, 7), dtype=jnp.float32)
    ref_small = _reference(x_small, weight, bias, running_mean, running_var, eps)
    out_small = frozen_batchnorm2d(x_small, weight, bias, running_mean,
                                   running_var, eps=eps)
    out_small = jax.block_until_ready(out_small)
    assert jnp.allclose(out_small, ref_small, atol=1e-5, rtol=1e-5), \
        "fallback mismatch vs reference"

    print("KERNEL_OK")
</pallas_src>

<mosaic_0001>
module attributes {stable_mosaic.version = 11 : i64} {
  func.func @_frozen_bn_kernel(%arg0: i32, %arg1: i32, %arg2: memref<8x256xf32, #tpu.memory_space<vmem>>, %arg3: memref<8x2xf32, #tpu.memory_space<vmem>>, %arg4: memref<8x256xf32, #tpu.memory_space<vmem>>) attributes {dimension_semantics = [#tpu.dimension_semantics<parallel>, #tpu.dimension_semantics<parallel>], iteration_bounds = array<i64: 1, 1>, scalar_prefetch = 0 : i64, scratch_operands = 0 : i64, tpu.core_type = #tpu.core_type<tc>, window_params = [{transform_indices = @transform_0, window_bounds = array<i64: 8, 256>}, {transform_indices = @transform_1, window_bounds = array<i64: 8, 2>}, {transform_indices = @transform_2, window_bounds = array<i64: 8, 256>}]} {
    %c0 = arith.constant 0 : index
    %c0_0 = arith.constant 0 : index
    %0 = vector.load %arg2[%c0, %c0_0] : memref<8x256xf32, #tpu.memory_space<vmem>>, vector<8x256xf32>
    %c0_1 = arith.constant 0 : index
    %c0_2 = arith.constant 0 : index
    %1 = vector.load %arg3[%c0_1, %c0_2] : memref<8x2xf32, #tpu.memory_space<vmem>>, vector<8x1xf32>
    %c0_3 = arith.constant 0 : index
    %c1 = arith.constant 1 : index
    %2 = vector.load %arg3[%c0_3, %c1] : memref<8x2xf32, #tpu.memory_space<vmem>>, vector<8x1xf32>
    %3 = vector.broadcast %1 : vector<8x1xf32> to vector<8x256xf32>
    %4 = arith.mulf %0, %3 : vector<8x256xf32>
    %5 = vector.broadcast %2 : vector<8x1xf32> to vector<8x256xf32>
    %6 = arith.addf %4, %5 : vector<8x256xf32>
    %c0_4 = arith.constant 0 : index
    %c0_5 = arith.constant 0 : index
    %7 = vector.load %arg4[%c0_4, %c0_5] : memref<8x256xf32, #tpu.memory_space<vmem>>, vector<8x256xf32>
    tpu.vector_store %arg4[%c0_4, %c0_5], %6 {strides = array<i32>} : memref<8x256xf32, #tpu.memory_space<vmem>>, vector<8x256xf32>,
    return
  }
  func.func @transform_0(%arg0: i32, %arg1: i32) -> (i32, i32) {
    %c0_i32 = arith.constant 0 : i32
    return %arg0, %arg1 : i32, i32
  }
  func.func @transform_1(%arg0: i32, %arg1: i32) -> (i32, i32) {
    %c0_i32 = arith.constant 0 : i32
    %c0_i32_0 = arith.constant 0 : i32
    return %arg0, %c0_i32 : i32, i32
  }
  func.func @transform_2(%arg0: i32, %arg1: i32) -> (i32, i32) {
    %c0_i32 = arith.constant 0 : i32
    return %arg0, %arg1 : i32, i32
  }
}

</mosaic_0001>

<llo_original>
// kernel: tile.19
$region0: #{tile.19}
  %s0 = inlined_call_operand.vmem [shape: f32[2,4], index: 0, kind: input, shape index: {}]
  %s1 = inlined_call_operand.vmem [shape: f32[8,1], index: 1, kind: output, shape index: {}]
  $region1: #{tile.19} parent=0
    #allocation0 [shape = 'u8[4096]{0}', space=vmem, size = 0x1000, scoped, tag = 'scoped mem for output reshape']
    #allocation1 [shape = 'u8[4096]{0}', space=vmem, size = 0x1000, scoped, tag = 'scoped mem for input reshape']
    %s3 = sshll.u32 1, 2
    %s4 = ssub.s32 %s3, 1
    %v5 = vld [vmem:[%s0] sm:%s4]
    %6 = vst [vmem:[#allocation1] sm:%s4] %v5
    %v7 = vld [vmem:[#allocation1] sm:$0x1]
    %vm8 = vcmask 31744
    %9 = vst.msk [vmem:[#allocation0] sm:$0x1] %vm8, %v7
    %s10 = scalar_lea.vmem [#allocation1], 1
    %v11 = vld [vmem:[%s10] sm:$0x1]
    %12 = vrot.lane.b32.xlu0 %v11, 4
    %v13 = vpop.permute.xlu0 %12
    %vm14 = vcmask 64544
    %15 = vst.msk [vmem:[#allocation0] sm:$0x1] %vm14, %v13
    %s17 = sshll.u32 1, 1
    %s18 = ssub.s32 %s17, 1
    %v20 = vld [vmem:[#allocation0] sm:%s18]
    %s21 = sshll.u32 1, 1
    %s22 = ssub.s32 %s21, 1
    %23 = vst [vmem:[%s1] sm:%s22] %v20

// kernel: tile.17
$region0: #{tile.17}
  #allocation0 [shape = 's32[1]{0}', space=sflag, size = 0x4, scoped, tag = 'scoped memory for tile.17']
  %s0 = inlined_call_operand.vmem [shape: f32[4], index: 0, kind: input, shape index: {}]
  %s1 = inlined_call_operand.vmem [shape: f32[2,4], index: 1, kind: output, shape index: {}]
  // Predicated region
  $region2: #{tile.17} parent=0 // pred_check
    _
  $region3: #{tile.17} parent=0 // pred_check_branch
    %3 = sbr.rel (0) target = $region5
  $region4: #{tile.17} parent=0 // pred_region
    _
  $region5: #{tile.17} parent=0 // pred_fallthru
    _
  %v4 = vld [vmem:[%s0] ss:$0 sm:$0xff]
  %5 = vst [vmem:[%s1] sm:$0x3] %v4

// kernel: frozen_batchnorm2d.1
$region0: #{frozen_batchnorm2d.1}
  #allocation0 [shape = 'u32[]', space=smem, size = 0x4, offset = 0x4, fixed_abs, tag = 'smem constant byte address 0x4 - core index']
  #allocation1 [shape = 'u32[144,128]{1,0:T(1,128)}', space=vmem, size = 0x12000, scoped, tag = 'internal scratch']
  %s0 = inlined_call_operand.vmem [shape: f32[8,256], index: 0, kind: input, shape index: {}]
  %s1 = inlined_call_operand.vmem [shape: f32[8,2], index: 1, kind: input, shape index: {}]
  %s2 = inlined_call_operand.vmem [shape: f32[8,256], index: 2, kind: output, shape index: {}]
  %s3 = sld [smem:[#allocation0]]
  $region18: #{frozen_batchnorm2d.1} parent=0
    _
  %s5 = ssub.s32 1, %s3
  %s6 = scalar_select 0, %s5, %s3
  // Predicated region
  $region2: #{frozen_batchnorm2d.1} parent=0 // pred_check
    _
  $region3: #{frozen_batchnorm2d.1} parent=0 // pred_check_branch
    %8 = sbr.rel (0) target = $region5
  $region4: #{frozen_batchnorm2d.1} parent=0 // pred_region
    _
  $region5: #{frozen_batchnorm2d.1} parent=0 // pred_fallthru
    _
  // Predicated region
  $region6: #{frozen_batchnorm2d.1} parent=0 // pred_check
    _
  $region7: #{frozen_batchnorm2d.1} parent=0 // pred_check_branch
    %10 = sbr.rel (0) target = $region9
  $region8: #{frozen_batchnorm2d.1} parent=0 // pred_region
    _
  $region9: #{frozen_batchnorm2d.1} parent=0 // pred_fallthru
    _
  %v11 = vld [vmem:[%s0] sm:$0xff]
  %v12 = vld [vmem:[%s0 + $0x8] sm:$0xff]
  %v13 = vld [vmem:[%s1] sm:$0xff]
  %15 = vset.pattern.permute.xlu0 0
  %16 = vperm.xlu0 %15, %v13
  %v17 = vpop.permute.xlu0 %16
  %v19 = vmul.f32 %v11, %v17
  %v20 = vmul.f32 %v12, %v17
  %21 = vset.pattern.permute.xlu0 1
  %22 = vperm.xlu0 %21, %v13
  %v23 = vpop.permute.xlu0 %22
  %v25 = vadd.f32 %v19, %v23
  %v26 = vadd.f32 %v20, %v23
  %27 = vst [vmem:[%s2] sm:$0xff] %v25
  %28 = vst [vmem:[%s2 + $0x8] sm:$0xff] %v26
  // Predicated region
  $region10: #{frozen_batchnorm2d.1} parent=0 // pred_check
    _
  $region11: #{frozen_batchnorm2d.1} parent=0 // pred_check_branch
    %30 = sbr.rel (0) target = $region13
  $region12: #{frozen_batchnorm2d.1} parent=0 // pred_region
    _
  $region13: #{frozen_batchnorm2d.1} parent=0 // pred_fallthru
    _
  // Predicated region
  $region14: #{frozen_batchnorm2d.1} parent=0 // pred_check
    _
  $region15: #{frozen_batchnorm2d.1} parent=0 // pred_check_branch
    %32 = sbr.rel (0) target = $region17
  $region16: #{frozen_batchnorm2d.1} parent=0 // pred_region
    _
  $region17: #{frozen_batchnorm2d.1} parent=0 // pred_fallthru
    _

</llo_original>
